<compile_context>
chip_gen: v6e
topology: v6e:2x2x1
jax: 0.10.0
libtpu: 0.0.40
codegen_flags: <defaults>
</compile_context>

<pallas_src>
import math

import jax
import jax.numpy as jnp
from jax.experimental import pallas as pl
from jax.experimental.pallas import tpu as pltpu

IN_FEATURES = 6
H1 = 128
H2 = 64
OUT_FEATURES = 6
TILE_B_MAX = 8192            # max batch-tile rows per grid step
SMALL_B_XLA = 2048           # below this, fused XLA beats kernel-launch overhead
VMEM_LIMIT_BYTES = 48 * 1024 * 1024


def _round_up(n, m):
    return ((n + m - 1) // m) * m


def _mlp_kernel(x_ref, w1_ref, b1_ref, w2_ref, b2_ref, w3_ref, b3_ref, o_ref):
    # fc1 + relu  (bf16 operands on the MXU, f32 accumulation, f32 bias/ReLU)
    x = x_ref[...].astype(jnp.bfloat16)                               # (tile, 6)
    h1 = jnp.dot(x, w1_ref[...], preferred_element_type=jnp.float32) + b1_ref[...]
    h1 = jnp.maximum(h1, 0.0)
    # dropout(p=0.5): identity in eval / inference mode
    # TODO(synk): training-mode dropout (random mask + 1/(1-p) scale) not emitted;
    #             forward here matches model.eval() semantics.
    # fc2 + relu
    h2 = jnp.dot(h1.astype(jnp.bfloat16), w2_ref[...],
                 preferred_element_type=jnp.float32) + b2_ref[...]
    h2 = jnp.maximum(h2, 0.0)
    # fc3 (no activation)
    o_ref[...] = (jnp.dot(h2.astype(jnp.bfloat16), w3_ref[...],
                          preferred_element_type=jnp.float32)
                  + b3_ref[...]).astype(o_ref.dtype)


def prep_params(params):
    """One-time weight prep: transpose and cast matmul operands to bf16.
    PyTorch layout in: W is (out_f, in_f), b is (out_f,).  No padding needed —
    the kernel uses full-extent (6 / 128 / 64 / 6) blocks directly."""
    return {
        "w1": params["w1"].T.astype(jnp.bfloat16),                  # (6, 128)
        "b1": params["b1"].reshape(1, H1).astype(jnp.float32),      # (1, 128)
        "w2": params["w2"].T.astype(jnp.bfloat16),                  # (128, 64)
        "b2": params["b2"].reshape(1, H2).astype(jnp.float32),      # (1, 64)
        "w3": params["w3"].T.astype(jnp.bfloat16),                  # (64, 6)
        "b3": params["b3"].reshape(1, OUT_FEATURES).astype(jnp.float32),  # (1, 6)
    }


def _forward_pallas(x, prepped):
    """Pallas path: batch tiled over a 1-D grid, weights/biases resident in VMEM."""
    B, in_f = x.shape
    assert in_f == IN_FEATURES

    # Tile selection: multiple of 8 rows; >= 2 grid steps for nontrivial B (so
    # "parallel" can use both TCs on v7x); capped at TILE_B_MAX so the per-step
    # live set (x/out double buffers + h1/h2 intermediates) fits VMEM everywhere.
    B8 = _round_up(B, 8)
    tile = min(TILE_B_MAX, max(8, _round_up(-(-B8 // 2), 8)))
    B_pad = _round_up(B8, tile)
    grid = (B_pad // tile,)

    # Only remaining wrapper op: zero-pad batch rows (skipped when already aligned).
    x_p = x if B_pad == B else jnp.pad(x, ((0, B_pad - B), (0, 0)))

    out_p = pl.pallas_call(
        _mlp_kernel,
        out_shape=jax.ShapeDtypeStruct((B_pad, OUT_FEATURES), jnp.float32),
        grid_spec=pl.GridSpec(
            grid=grid,
            in_specs=[
                pl.BlockSpec((tile, IN_FEATURES), lambda i: (i, 0)),   # x: tiled over batch
                pl.BlockSpec((IN_FEATURES, H1), lambda i: (0, 0)),     # weights/biases resident
                pl.BlockSpec((1, H1), lambda i: (0, 0)),
                pl.BlockSpec((H1, H2), lambda i: (0, 0)),
                pl.BlockSpec((1, H2), lambda i: (0, 0)),
                pl.BlockSpec((H2, OUT_FEATURES), lambda i: (0, 0)),
                pl.BlockSpec((1, OUT_FEATURES), lambda i: (0, 0)),
            ],
            out_specs=pl.BlockSpec((tile, OUT_FEATURES), lambda i: (i, 0)),
        ),
        compiler_params=pltpu.CompilerParams(
            dimension_semantics=("parallel",),
            vmem_limit_bytes=VMEM_LIMIT_BYTES,
        ),
    )(x_p, prepped["w1"], prepped["b1"], prepped["w2"], prepped["b2"],
      prepped["w3"], prepped["b3"])

    return out_p if B_pad == B else out_p[:B, :]


def _forward_xla(x, prepped):
    """Fused-XLA fallback for small batches (pallas_call fixed cost dominates there);
    same bf16-operand / f32-accumulate math as the kernel."""
    h1 = jnp.maximum(
        jnp.dot(x.astype(jnp.bfloat16), prepped["w1"],
                preferred_element_type=jnp.float32) + prepped["b1"], 0.0)
    h2 = jnp.maximum(
        jnp.dot(h1.astype(jnp.bfloat16), prepped["w2"],
                preferred_element_type=jnp.float32) + prepped["b2"], 0.0)
    return jnp.dot(h2.astype(jnp.bfloat16), prepped["w3"],
                   preferred_element_type=jnp.float32) + prepped["b3"]


def lotto_forward(x, prepped):
    """x: (B, 6) float32 -> (B, 6) float32.  Shape-based dispatch (static under jit)."""
    if x.shape[0] < SMALL_B_XLA:
        return _forward_xla(x, prepped)
    return _forward_pallas(x, prepped)


lotto_forward_jit = jax.jit(lotto_forward)
_forward_pallas_jit = jax.jit(_forward_pallas)


def init_params(key):
    """Deterministic init matching nn.Linear default: U(-1/sqrt(fan_in), 1/sqrt(fan_in))."""
    ks = jax.random.split(key, 6)

    def linear(kw, kb, out_f, in_f):
        bound = 1.0 / math.sqrt(in_f)
        w = jax.random.uniform(kw, (out_f, in_f), jnp.float32, -bound, bound)
        b = jax.random.uniform(kb, (out_f,), jnp.float32, -bound, bound)
        return w, b

    w1, b1 = linear(ks[0], ks[1], H1, IN_FEATURES)
    w2, b2 = linear(ks[2], ks[3], H2, H1)
    w3, b3 = linear(ks[4], ks[5], OUT_FEATURES, H2)
    return {"w1": w1, "b1": b1, "w2": w2, "b2": b2, "w3": w3, "b3": b3}


def _reference(x, p):
    """Reference with the same bf16-operand / f32-accumulate quantization as the kernel."""
    h1 = jnp.dot(x.astype(jnp.bfloat16), p["w1"].T.astype(jnp.bfloat16),
                 preferred_element_type=jnp.float32) + p["b1"]
    h1 = jnp.maximum(h1, 0.0)
    h2 = jnp.dot(h1.astype(jnp.bfloat16), p["w2"].T.astype(jnp.bfloat16),
                 preferred_element_type=jnp.float32) + p["b2"]
    h2 = jnp.maximum(h2, 0.0)
    return jnp.dot(h2.astype(jnp.bfloat16), p["w3"].T.astype(jnp.bfloat16),
                   preferred_element_type=jnp.float32) + p["b3"]


if __name__ == "__main__":
    key = jax.random.PRNGKey(0)
    k_param, k_x = jax.random.split(key)
    params = init_params(k_param)
    prepped = prep_params(params)  # one-time weight prep (hoisted out of forward)

    ok = True
    # 4: single-tile; 20: padded rows + grid=2; 72: uneven tile + grid=2.
    for batch in (4, 20, 72):
        kx = jax.random.fold_in(k_x, batch)
        x = jax.random.uniform(kx, (batch, IN_FEATURES), jnp.float32, 1.0, 49.0)
        ref = _reference(x, params)

        # Pallas kernel path (forced, so the kernel itself is exercised at small shapes).
        out_k = jax.block_until_ready(_forward_pallas_jit(x, prepped))
        # Dispatching wrapper (falls back to fused XLA at these small batches).
        out_d = jax.block_until_ready(lotto_forward_jit(x, prepped))

        for name, out in (("pallas", out_k), ("dispatch", out_d)):
            if out.shape != (batch, OUT_FEATURES):
                ok = False
                print(f"BAD SHAPE {name} batch={batch}: {out.shape}")
                continue
            err = float(jnp.max(jnp.abs(out - ref)))
            if not jnp.allclose(out, ref, atol=1e-2, rtol=1e-2):
                ok = False
                print(f"MISMATCH {name} batch={batch} max_abs_err={err}")

    if ok:
        print("KERNEL_OK")
</pallas_src>

<mosaic_0001>
module attributes {stable_mosaic.version = 11 : i64} {
  func.func @_mlp_kernel(%arg0: i32, %arg1: memref<8x6xf32, #tpu.memory_space<vmem>>, %arg2: memref<6x128xbf16, #tpu.memory_space<vmem>>, %arg3: memref<1x128xf32, #tpu.memory_space<vmem>>, %arg4: memref<128x64xbf16, #tpu.memory_space<vmem>>, %arg5: memref<1x64xf32, #tpu.memory_space<vmem>>, %arg6: memref<64x6xbf16, #tpu.memory_space<vmem>>, %arg7: memref<1x6xf32, #tpu.memory_space<vmem>>, %arg8: memref<8x6xf32, #tpu.memory_space<vmem>>) attributes {dimension_semantics = [#tpu.dimension_semantics<parallel>], iteration_bounds = array<i64: 1>, scalar_prefetch = 0 : i64, scratch_operands = 0 : i64, tpu.core_type = #tpu.core_type<tc>, window_params = [{transform_indices = @transform_0, window_bounds = array<i64: 8, 6>}, {pipeline_mode = #tpu.pipeline_mode<synchronous>, transform_indices = @transform_1, window_bounds = array<i64: 6, 128>}, {pipeline_mode = #tpu.pipeline_mode<synchronous>, transform_indices = @transform_2, window_bounds = array<i64: 1, 128>}, {pipeline_mode = #tpu.pipeline_mode<synchronous>, transform_indices = @transform_3, window_bounds = array<i64: 128, 64>}, {pipeline_mode = #tpu.pipeline_mode<synchronous>, transform_indices = @transform_4, window_bounds = array<i64: 1, 64>}, {pipeline_mode = #tpu.pipeline_mode<synchronous>, transform_indices = @transform_5, window_bounds = array<i64: 64, 6>}, {pipeline_mode = #tpu.pipeline_mode<synchronous>, transform_indices = @transform_6, window_bounds = array<i64: 1, 6>}, {transform_indices = @transform_7, window_bounds = array<i64: 8, 6>}]} {
    %c0 = arith.constant 0 : index
    %c0_0 = arith.constant 0 : index
    %0 = vector.load %arg1[%c0, %c0_0] : memref<8x6xf32, #tpu.memory_space<vmem>>, vector<8x6xf32>
    %1 = arith.truncf %0 : vector<8x6xf32> to vector<8x6xbf16>
    %c0_1 = arith.constant 0 : index
    %c0_2 = arith.constant 0 : index
    %2 = vector.load %arg2[%c0_1, %c0_2] : memref<6x128xbf16, #tpu.memory_space<vmem>>, vector<6x128xbf16>
    %cst = arith.constant dense<0.000000e+00> : vector<8x128xf32>
    %3 = tpu.matmul %1, %2, %cst {dimension_numbers = #tpu.dot_dimension_numbers<[1], [0], [0], [1], [0, 0, 1, 1], [], []>} : vector<8x6xbf16>, vector<6x128xbf16>, vector<8x128xf32> -> vector<8x128xf32>
    %c0_3 = arith.constant 0 : index
    %c0_4 = arith.constant 0 : index
    %4 = vector.load %arg3[%c0_3, %c0_4] : memref<1x128xf32, #tpu.memory_space<vmem>>, vector<1x128xf32>
    %5 = vector.broadcast %4 : vector<1x128xf32> to vector<8x128xf32>
    %6 = arith.addf %3, %5 : vector<8x128xf32>
    %cst_5 = arith.constant 0.000000e+00 : f32
    %7 = vector.broadcast %cst_5 : f32 to vector<8x128xf32>
    %8 = arith.maximumf %6, %7 : vector<8x128xf32>
    %9 = arith.truncf %8 : vector<8x128xf32> to vector<8x128xbf16>
    %c0_6 = arith.constant 0 : index
    %c0_7 = arith.constant 0 : index
    %10 = vector.load %arg4[%c0_6, %c0_7] : memref<128x64xbf16, #tpu.memory_space<vmem>>, vector<128x64xbf16>
    %cst_8 = arith.constant dense<0.000000e+00> : vector<8x64xf32>
    %11 = tpu.matmul %9, %10, %cst_8 {dimension_numbers = #tpu.dot_dimension_numbers<[1], [0], [0], [1], [0, 0, 1, 1], [], []>} : vector<8x128xbf16>, vector<128x64xbf16>, vector<8x64xf32> -> vector<8x64xf32>
    %c0_9 = arith.constant 0 : index
    %c0_10 = arith.constant 0 : index
    %12 = vector.load %arg5[%c0_9, %c0_10] : memref<1x64xf32, #tpu.memory_space<vmem>>, vector<1x64xf32>
    %13 = vector.broadcast %12 : vector<1x64xf32> to vector<8x64xf32>
    %14 = arith.addf %11, %13 : vector<8x64xf32>
    %cst_11 = arith.constant 0.000000e+00 : f32
    %15 = vector.broadcast %cst_11 : f32 to vector<8x64xf32>
    %16 = arith.maximumf %14, %15 : vector<8x64xf32>
    %17 = arith.truncf %16 : vector<8x64xf32> to vector<8x64xbf16>
    %c0_12 = arith.constant 0 : index
    %c0_13 = arith.constant 0 : index
    %18 = vector.load %arg6[%c0_12, %c0_13] : memref<64x6xbf16, #tpu.memory_space<vmem>>, vector<64x6xbf16>
    %cst_14 = arith.constant dense<0.000000e+00> : vector<8x6xf32>
    %19 = tpu.matmul %17, %18, %cst_14 {dimension_numbers = #tpu.dot_dimension_numbers<[1], [0], [0], [1], [0, 0, 1, 1], [], []>} : vector<8x64xbf16>, vector<64x6xbf16>, vector<8x6xf32> -> vector<8x6xf32>
    %c0_15 = arith.constant 0 : index
    %c0_16 = arith.constant 0 : index
    %20 = vector.load %arg7[%c0_15, %c0_16] : memref<1x6xf32, #tpu.memory_space<vmem>>, vector<1x6xf32>
    %21 = vector.broadcast %20 : vector<1x6xf32> to vector<8x6xf32>
    %22 = arith.addf %19, %21 : vector<8x6xf32>
    %c0_17 = arith.constant 0 : index
    %c0_18 = arith.constant 0 : index
    %23 = vector.load %arg8[%c0_17, %c0_18] : memref<8x6xf32, #tpu.memory_space<vmem>>, vector<8x6xf32>
    tpu.vector_store %arg8[%c0_17, %c0_18], %22 {strides = array<i32>} : memref<8x6xf32, #tpu.memory_space<vmem>>, vector<8x6xf32>,
    return
  }
  func.func @transform_0(%arg0: i32) -> (i32, i32) {
    %c0_i32 = arith.constant 0 : i32
    %c0_i32_0 = arith.constant 0 : i32
    return %arg0, %c0_i32 : i32, i32
  }
  func.func @transform_1(%arg0: i32) -> (i32, i32) {
    %c0_i32 = arith.constant 0 : i32
    %c0_i32_0 = arith.constant 0 : i32
    %c0_i32_1 = arith.constant 0 : i32
    return %c0_i32, %c0_i32_0 : i32, i32
  }
  func.func @transform_2(%arg0: i32) -> (i32, i32) {
    %c0_i32 = arith.constant 0 : i32
    %c0_i32_0 = arith.constant 0 : i32
    %c0_i32_1 = arith.constant 0 : i32
    return %c0_i32, %c0_i32_0 : i32, i32
  }
  func.func @transform_3(%arg0: i32) -> (i32, i32) {
    %c0_i32 = arith.constant 0 : i32
    %c0_i32_0 = arith.constant 0 : i32
    %c0_i32_1 = arith.constant 0 : i32
    return %c0_i32, %c0_i32_0 : i32, i32
  }
  func.func @transform_4(%arg0: i32) -> (i32, i32) {
    %c0_i32 = arith.constant 0 : i32
    %c0_i32_0 = arith.constant 0 : i32
    %c0_i32_1 = arith.constant 0 : i32
    return %c0_i32, %c0_i32_0 : i32, i32
  }
  func.func @transform_5(%arg0: i32) -> (i32, i32) {
    %c0_i32 = arith.constant 0 : i32
    %c0_i32_0 = arith.constant 0 : i32
    %c0_i32_1 = arith.constant 0 : i32
    return %c0_i32, %c0_i32_0 : i32, i32
  }
  func.func @transform_6(%arg0: i32) -> (i32, i32) {
    %c0_i32 = arith.constant 0 : i32
    %c0_i32_0 = arith.constant 0 : i32
    %c0_i32_1 = arith.constant 0 : i32
    return %c0_i32, %c0_i32_0 : i32, i32
  }
  func.func @transform_7(%arg0: i32) -> (i32, i32) {
    %c0_i32 = arith.constant 0 : i32
    %c0_i32_0 = arith.constant 0 : i32
    return %arg0, %c0_i32 : i32, i32
  }
}

</mosaic_0001>

<llo_original>
// kernel: _forward_pallas.1
$region0: #{_forward_pallas.1}
  #allocation0 [shape = 'u32[]', space=smem, size = 0x4, offset = 0x4, fixed_abs, tag = 'smem constant byte address 0x4 - core index']
  #allocation1 [shape = 'u32[144,128]{1,0:T(1,128)}', space=vmem, size = 0x12000, scoped, tag = 'internal scratch']
  %s0 = inlined_call_operand.vmem [shape: f32[8,6], index: 0, kind: input, shape index: {}]
  %s1 = inlined_call_operand.vmem [shape: bf16[6,128], index: 1, kind: input, shape index: {}]
  %s2 = inlined_call_operand.vmem [shape: f32[1,128], index: 2, kind: input, shape index: {}]
  %s3 = inlined_call_operand.vmem [shape: bf16[128,64], index: 3, kind: input, shape index: {}]
  %s4 = inlined_call_operand.vmem [shape: f32[1,64], index: 4, kind: input, shape index: {}]
  %s5 = inlined_call_operand.vmem [shape: bf16[64,6], index: 5, kind: input, shape index: {}]
  %s6 = inlined_call_operand.vmem [shape: f32[1,6], index: 6, kind: input, shape index: {}]
  %s7 = inlined_call_operand.vmem [shape: f32[8,6], index: 7, kind: output, shape index: {}]
  %s8 = sld [smem:[#allocation0]]
  $region38: #{_forward_pallas.1} parent=0
    _
  %s10 = ssub.s32 1, %s8
  %s11 = scalar_select 0, %s10, %s8
  // Predicated region
  $region2: #{_forward_pallas.1} parent=0 // pred_check
    _
  $region3: #{_forward_pallas.1} parent=0 // pred_check_branch
    %13 = sbr.rel (0) target = $region5
  $region4: #{_forward_pallas.1} parent=0 // pred_region
    _
  $region5: #{_forward_pallas.1} parent=0 // pred_fallthru
    _
  // Predicated region
  $region6: #{_forward_pallas.1} parent=0 // pred_check
    _
  $region7: #{_forward_pallas.1} parent=0 // pred_check_branch
    %15 = sbr.rel (0) target = $region9
  $region8: #{_forward_pallas.1} parent=0 // pred_region
    _
  $region9: #{_forward_pallas.1} parent=0 // pred_fallthru
    _
  // Predicated region
  $region10: #{_forward_pallas.1} parent=0 // pred_check
    _
  $region11: #{_forward_pallas.1} parent=0 // pred_check_branch
    %17 = sbr.rel (0) target = $region13
  $region12: #{_forward_pallas.1} parent=0 // pred_region
    _
  $region13: #{_forward_pallas.1} parent=0 // pred_fallthru
    _
  // Predicated region
  $region14: #{_forward_pallas.1} parent=0 // pred_check
    _
  $region15: #{_forward_pallas.1} parent=0 // pred_check_branch
    %19 = sbr.rel (0) target = $region17
  $region16: #{_forward_pallas.1} parent=0 // pred_region
    _
  $region17: #{_forward_pallas.1} parent=0 // pred_fallthru
    _
  // Predicated region
  $region18: #{_forward_pallas.1} parent=0 // pred_check
    _
  $region19: #{_forward_pallas.1} parent=0 // pred_check_branch
    %21 = sbr.rel (0) target = $region21
  $region20: #{_forward_pallas.1} parent=0 // pred_region
    _
  $region21: #{_forward_pallas.1} parent=0 // pred_fallthru
    _
  // Predicated region
  $region22: #{_forward_pallas.1} parent=0 // pred_check
    _
  $region23: #{_forward_pallas.1} parent=0 // pred_check_branch
    %23 = sbr.rel (0) target = $region25
  $region24: #{_forward_pallas.1} parent=0 // pred_region
    _
  $region25: #{_forward_pallas.1} parent=0 // pred_fallthru
    _
  // Predicated region
  $region26: #{_forward_pallas.1} parent=0 // pred_check
    _
  $region27: #{_forward_pallas.1} parent=0 // pred_check_branch
    %25 = sbr.rel (0) target = $region29
  $region28: #{_forward_pallas.1} parent=0 // pred_region
    _
  $region29: #{_forward_pallas.1} parent=0 // pred_fallthru
    _
  %v27 = vld [vmem:[%s0] sm:$0xff]
  %v28 = vpack.c.bf16 %v27, %v27
  %v29 = vld [vmem:[%s1] sm:$0x7]
  %v30 = vld [vmem:[%s2] sm:$0x1]
  %v32 = vlaneseq
  %v33 = vshrl.u32 %v32, 7
  %v34 = vsub.s32 0, %v33
  %v35 = vrot.slane %v30, %v34
  %vm37 = vcmask 48128
  %v39 = vsel %vm37, %v28, 0
  %vm41 = vcmask 1042432
  %v43 = vsel %vm41, %v29, 0
  %45 = vmatprep.subr.bf16.mxu0 0
  %46 = vmatpush1.bf16.msra.mxu0 0
  %47 = vmatprep.subr.bf16.mxu0 0
  %48 = vmatpush1.bf16.msra.mxu0 0
  %49 = vmatprep.subr.bf16.mxu0 0
  %50 = vmatpush1.bf16.msra.mxu0 0
  %51 = vmatprep.subr.bf16.mxu0 0
  %52 = vmatpush1.bf16.msra.mxu0 0
  %53 = vmatprep.subr.bf16.mxu0 0
  %54 = vmatpush1.bf16.msra.mxu0 0
  %55 = vmatprep.subr.bf16.mxu0 0
  %56 = vmatpush1.bf16.msra.mxu0 0
  %57 = vmatprep.subr.bf16.mxu0 0
  %58 = vmatpush1.bf16.msra.mxu0 0
  %59 = vmatprep.subr.bf16.mxu0 0
  %60 = vmatpush1.bf16.msra.mxu0 %v43
  %61 = vmatprep.subr.bf16.mxu0 0
  %62 = vmatpush2.bf16.msra.mxu0 0
  %63 = vmatprep.subr.bf16.mxu0 0
  %64 = vmatpush2.bf16.msra.mxu0 0
  %65 = vmatprep.subr.bf16.mxu0 0
  %66 = vmatpush2.bf16.msra.mxu0 0
  %67 = vmatprep.subr.bf16.mxu0 0
  %68 = vmatpush2.bf16.msra.mxu0 0
  %69 = vmatprep.subr.bf16.mxu0 0
  %70 = vmatpush2.bf16.msra.mxu0 0
  %71 = vmatprep.subr.bf16.mxu0 0
  %72 = vmatpush2.bf16.msra.mxu0 0
  %73 = vmatprep.subr.bf16.mxu0 0
  %74 = vmatpush2.bf16.msra.mxu0 0
  %75 = vmatprep.subr.bf16.mxu0 0
  %76 = vmatpush2.bf16.msra.mxu0 0
  %77 = vmatprep.mubr.bf16.mxu0 0
  %78 = vmatmul.mubr.bf16.gmra.mxu0 %v39
  %v79 = vpop.f32.mrf.mxu0
  %v80 = vadd.f32 %v35, %v79
  %v81 = vpop.f32.mrf.mxu0
  %v82 = vpop.f32.mrf.mxu0
  %v83 = vpop.f32.mrf.mxu0
  %84 = vdwg.mxu0
  %v85 = vmax.f32 %v80, 0.0
  %v86 = vpack.c.bf16 %v85, %v85
  %v87 = vld [vmem:[%s3] sm:$0xf]
  %v88 = vld [vmem:[%s3 + $0x4] sm:$0xf]
  %v89 = vld [vmem:[%s3 + $0x8] sm:$0xf]
  %v90 = vld [vmem:[%s3 + $0xc] sm:$0xf]
  %v91 = vld [vmem:[%s3 + $0x10] sm:$0xf]
  %v92 = vld [vmem:[%s3 + $0x14] sm:$0xf]
  %v93 = vld [vmem:[%s3 + $0x18] sm:$0xf]
  %v94 = vld [vmem:[%s3 + $0x1c] sm:$0xf]
  %v95 = vld [vmem:[%s3 + $0x20] sm:$0xf]
  %v96 = vld [vmem:[%s3 + $0x24] sm:$0xf]
  %v97 = vld [vmem:[%s3 + $0x28] sm:$0xf]
  %v98 = vld [vmem:[%s3 + $0x2c] sm:$0xf]
  %v99 = vld [vmem:[%s3 + $0x30] sm:$0xf]
  %v100 = vld [vmem:[%s3 + $0x34] sm:$0xf]
  %v101 = vld [vmem:[%s3 + $0x38] sm:$0xf]
  %v102 = vld [vmem:[%s3 + $0x3c] sm:$0xf]
  %v103 = vld [vmem:[%s4] sm:$0x1]
  %v105 = vlaneseq
  %v106 = vshrl.u32 %v105, 7
  %v107 = vsub.s32 0, %v106
  %v108 = vrot.slane %v103, %v107
  %v126 = vunpack.c.l.b16 %v87
  %v127 = vunpack.c.l.b16 %v88
  %v128 = vunpack.c.l.b16 %v89
  %v129 = vunpack.c.l.b16 %v90
  %v130 = vunpack.c.l.b16 %v91
  %v131 = vunpack.c.l.b16 %v92
  %v132 = vunpack.c.l.b16 %v93
  %v133 = vunpack.c.l.b16 %v94
  %v134 = vunpack.c.l.b16 %v95
  %v135 = vunpack.c.l.b16 %v96
  %v136 = vunpack.c.l.b16 %v97
  %v137 = vunpack.c.l.b16 %v98
  %v138 = vunpack.c.l.b16 %v99
  %v139 = vunpack.c.l.b16 %v100
  %v140 = vunpack.c.l.b16 %v101
  %v141 = vunpack.c.l.b16 %v102
  %v142 = vpack.c.b16 %v127, %v126
  %v143 = vpack.c.b16 %v129, %v128
  %v144 = vpack.c.b16 %v131, %v130
  %v145 = vpack.c.b16 %v133, %v132
  %v146 = vpack.c.b16 %v135, %v134
  %v147 = vpack.c.b16 %v137, %v136
  %v148 = vpack.c.b16 %v139, %v138
  %v149 = vpack.c.b16 %v141, %v140
  %158 = vmatprep.subr.bf16.mxu0 0
  %159 = vmatpush1.bf16.msra.mxu0 %v149
  %160 = vmatprep.subr.bf16.mxu0 0
  %161 = vmatpush1.bf16.msra.mxu0 %v148
  %162 = vmatprep.subr.bf16.mxu0 0
  %163 = vmatpush1.bf16.msra.mxu0 %v147
  %164 = vmatprep.subr.bf16.mxu0 0
  %165 = vmatpush1.bf16.msra.mxu0 %v146
  %166 = vmatprep.subr.bf16.mxu0 0
  %167 = vmatpush1.bf16.msra.mxu0 %v145
  %168 = vmatprep.subr.bf16.mxu0 0
  %169 = vmatpush1.bf16.msra.mxu0 %v144
  %170 = vmatprep.subr.bf16.mxu0 0
  %171 = vmatpush1.bf16.msra.mxu0 %v143
  %172 = vmatprep.subr.bf16.mxu0 0
  %173 = vmatpush1.bf16.msra.mxu0 %v142
  %174 = vmatprep.subr.bf16.mxu0 0
  %175 = vmatpush2.bf16.msra.mxu0 0
  %176 = vmatprep.subr.bf16.mxu0 0
  %177 = vmatpush2.bf16.msra.mxu0 0
  %178 = vmatprep.subr.bf16.mxu0 0
  %179 = vmatpush2.bf16.msra.mxu0 0
  %180 = vmatprep.subr.bf16.mxu0 0
  %181 = vmatpush2.bf16.msra.mxu0 0
  %182 = vmatprep.subr.bf16.mxu0 0
  %183 = vmatpush2.bf16.msra.mxu0 0
  %184 = vmatprep.subr.bf16.mxu0 0
  %185 = vmatpush2.bf16.msra.mxu0 0
  %186 = vmatprep.subr.bf16.mxu0 0
  %187 = vmatpush2.bf16.msra.mxu0 0
  %188 = vmatprep.subr.bf16.mxu0 0
  %189 = vmatpush2.bf16.msra.mxu0 0
  %190 = vmatprep.mubr.bf16.mxu0 0
  %191 = vmatmul.mubr.bf16.gmra.mxu0 %v86
  %v192 = vpop.f32.mrf.mxu0
  %v193 = vadd.f32 %v108, %v192
  %v194 = vpop.f32.mrf.mxu0
  %v195 = vpop.f32.mrf.mxu0
  %v196 = vpop.f32.mrf.mxu0
  %197 = vdwg.mxu0
  %v198 = vmax.f32 %v193, 0.0
  %v199 = vpack.c.bf16 %v198, %v198
  %v200 = vld [vmem:[%s5] sm:$0xf]
  %v201 = vld [vmem:[%s5 + $0x4] sm:$0xf]
  %v202 = vld [vmem:[%s5 + $0x8] sm:$0xf]
  %v203 = vld [vmem:[%s5 + $0xc] sm:$0xf]
  %v204 = vld [vmem:[%s5 + $0x10] sm:$0xf]
  %v205 = vld [vmem:[%s5 + $0x14] sm:$0xf]
  %v206 = vld [vmem:[%s5 + $0x18] sm:$0xf]
  %v207 = vld [vmem:[%s5 + $0x1c] sm:$0xf]
  %v208 = vld [vmem:[%s6] sm:$0x1]
  %v210 = vlaneseq
  %v211 = vshrl.u32 %v210, 7
  %v212 = vsub.s32 0, %v211
  %v213 = vrot.slane %v208, %v212
  %v223 = vunpack.c.l.b16 %v200
  %v224 = vunpack.c.l.b16 %v201
  %v225 = vunpack.c.l.b16 %v202
  %v226 = vunpack.c.l.b16 %v203
  %v227 = vunpack.c.l.b16 %v204
  %v228 = vunpack.c.l.b16 %v205
  %v229 = vunpack.c.l.b16 %v206
  %v230 = vunpack.c.l.b16 %v207
  %v231 = vpack.c.b16 %v224, %v223
  %v232 = vpack.c.b16 %v226, %v225
  %v233 = vpack.c.b16 %v228, %v227
  %v234 = vpack.c.b16 %v230, %v229
  %vm239 = vcmask 523264
  %v241 = vsel %vm239, %v199, 0
  %243 = vmatprep.subr.bf16.mxu0 0
  %244 = vmatpush1.bf16.msra.mxu0 0
  %245 = vmatprep.subr.bf16.mxu0 0
  %246 = vmatpush1.bf16.msra.mxu0 0
  %247 = vmatprep.subr.bf16.mxu0 0
  %248 = vmatpush1.bf16.msra.mxu0 0
  %249 = vmatprep.subr.bf16.mxu0 0
  %250 = vmatpush1.bf16.msra.mxu0 0
  %251 = vmatprep.subr.bf16.mxu0 0
  %252 = vmatpush1.bf16.msra.mxu0 %v234
  %253 = vmatprep.subr.bf16.mxu0 0
  %254 = vmatpush1.bf16.msra.mxu0 %v233
  %255 = vmatprep.subr.bf16.mxu0 0
  %256 = vmatpush1.bf16.msra.mxu0 %v232
  %257 = vmatprep.subr.bf16.mxu0 0
  %258 = vmatpush1.bf16.msra.mxu0 %v231
  %259 = vmatprep.subr.bf16.mxu0 0
  %260 = vmatpush2.bf16.msra.mxu0 0
  %261 = vmatprep.subr.bf16.mxu0 0
  %262 = vmatpush2.bf16.msra.mxu0 0
  %263 = vmatprep.subr.bf16.mxu0 0
  %264 = vmatpush2.bf16.msra.mxu0 0
  %265 = vmatprep.subr.bf16.mxu0 0
  %266 = vmatpush2.bf16.msra.mxu0 0
  %267 = vmatprep.subr.bf16.mxu0 0
  %268 = vmatpush2.bf16.msra.mxu0 0
  %269 = vmatprep.subr.bf16.mxu0 0
  %270 = vmatpush2.bf16.msra.mxu0 0
  %271 = vmatprep.subr.bf16.mxu0 0
  %272 = vmatpush2.bf16.msra.mxu0 0
  %273 = vmatprep.subr.bf16.mxu0 0
  %274 = vmatpush2.bf16.msra.mxu0 0
  %275 = vmatprep.mubr.bf16.mxu0 0
  %276 = vmatmul.mubr.bf16.gmra.mxu0 %v241
  %v277 = vpop.f32.mrf.mxu0
  %v278 = vadd.f32 %v213, %v277
  %v279 = vpop.f32.mrf.mxu0
  %v280 = vpop.f32.mrf.mxu0
  %v281 = vpop.f32.mrf.mxu0
  %282 = vdwg.mxu0
  %283 = vst.msk [vmem:[%s7] sm:$0xff] %vm37, %v278
  // Predicated region
  $region30: #{_forward_pallas.1} parent=0 // pred_check
    _
  $region31: #{_forward_pallas.1} parent=0 // pred_check_branch
    %285 = sbr.rel (0) target = $region33
  $region32: #{_forward_pallas.1} parent=0 // pred_region
    _
  $region33: #{_forward_pallas.1} parent=0 // pred_fallthru
    _
  // Predicated region
  $region34: #{_forward_pallas.1} parent=0 // pred_check
    _
  $region35: #{_forward_pallas.1} parent=0 // pred_check_branch
    %287 = sbr.rel (0) target = $region37
  $region36: #{_forward_pallas.1} parent=0 // pred_region
    _
  $region37: #{_forward_pallas.1} parent=0 // pred_fallthru
    _

</llo_original>
